<compile_context>
chip_gen: v5e
topology: v5e:2x2
jax: 0.10.0
libtpu: 0.0.40
codegen_flags: <defaults>
</compile_context>

<pallas_src>
import functools

import jax
import jax.numpy as jnp
import numpy as np
from jax import lax
from jax.experimental import pallas as pl
from jax.experimental.pallas import tpu as pltpu

NUM_INPUT = 784
NUM_HIDDEN = 30
NUM_OUTPUT = 10

PACK = 128      # packed feature width = one full vreg lane dimension
U1_OFF = 0      # lanes [0, 30)   hold u1
U2_OFF = 64     # lanes [64, 74)  hold u2


def _sigmoid(u):
    # sigmoid(u) == 0.5 * (tanh(u / 2) + 1): a single EUP transcendental on the
    # serial settle critical path (instead of exp + divide).
    return 0.5 * (jnp.tanh(0.5 * u) + 1.0)


def _ep_settle_kernel(c_ref, wbig_ref, u_ref, y_ref, *, steps, step_size, unroll):
    """Free-phase settle for one batch block; packed state held in vregs/VMEM.

    c    = [0.5*x@W1 + b1 | b2]      (Bb, 128)  loop-invariant drive
    wbig = packed [W2^T ; W2] blocks (128, 128) (padded rows/cols are zero)
    u    = packed [u1 | u2]          (Bb, 128)
    """
    c = c_ref[...]
    w = wbig_ref[...]
    keep = jnp.float32(1.0 - step_size)
    step = jnp.float32(step_size)

    def body(_, u):
        s = _sigmoid(u)                        # one tanh for the whole packed state
        ds = s * (1.0 - s)
        # Single well-shaped K=128 matmul replaces the two tiny W2 contractions.
        drive = jnp.dot(s.astype(w.dtype), w,
                        preferred_element_type=jnp.float32) + c
        # u - step*(u - drive*ds)  ==  (1-step)*u + step*(drive*ds)
        return keep * u + step * (drive * ds)

    # TODO(synk): clamped-phase term beta*(sigmoid(u2) - y_true)*ds2 omitted;
    #             forward() always settles with beta = 0.
    u = lax.fori_loop(0, steps, body, u_ref[...], unroll=unroll)
    # Lane-dense 128-wide store (unmasked vst); u2 lanes sliced in the wrapper.
    y_ref[...] = _sigmoid(u)


def _round_up(n, m):
    return ((n + m - 1) // m) * m


def equilibrium_propagation_forward(x, w1, w2, b1, b2, u1_init, u2_init, *,
                                    steps_free, step_size, block_b=1024,
                                    use_bf16_matmul=False):
    """Pallas implementation of EquilibriumPropagationNet.forward (free phase).

    Accepts a single example (x: (784,), u1: (30,), u2: (10,)) exactly like the
    torch module (u1/u2 random init is taken as an argument for determinism),
    or a batch (x: (B, 784), u1: (B, 30), u2: (B, 10)) whose rows settle
    independently with the same per-example dynamics.
    """
    xa = jnp.asarray(x, jnp.float32)
    single = (xa.ndim == 1)
    x2 = jnp.atleast_2d(xa)                                      # (B, 784)
    u1_2 = jnp.atleast_2d(jnp.asarray(u1_init, jnp.float32))     # (B, H)
    u2_2 = jnp.atleast_2d(jnp.asarray(u2_init, jnp.float32))     # (B, O)
    w1f = jnp.asarray(w1, jnp.float32)
    w2f = jnp.asarray(w2, jnp.float32)
    b1f = jnp.asarray(b1, jnp.float32).reshape(NUM_HIDDEN)
    b2f = jnp.asarray(b2, jnp.float32).reshape(NUM_OUTPUT)
    B = x2.shape[0]

    # --- Blocking: gridless single VMEM block for small/medium batches; for
    # larger batches an even-length "parallel" batch grid (v7x: 2 TensorCores).
    if B <= block_b:
        nb = 1
        bb = _round_up(max(B, 8), 8)
    else:
        nb = -(-B // block_b)
        if nb % 2 == 1:
            nb += 1                      # even grid -> balanced megacore split
        bb = _round_up(-(-B // nb), 8)
    bp = nb * bb

    # --- Loop-invariant packed drive (computed once by XLA; W1 never enters
    # the kernel, b2 broadcast hoisted out of the settle loop).
    c1 = 0.5 * (x2 @ w1f) + b1f[None, :]                         # (B, H)
    c = jnp.zeros((bp, PACK), jnp.float32)
    c = c.at[:B, U1_OFF:U1_OFF + NUM_HIDDEN].set(c1)
    c = c.at[:, U2_OFF:U2_OFF + NUM_OUTPUT].set(b2f[None, :])

    # --- Packed initial state [u1 | u2]; padded lanes/rows are zero.
    u0 = jnp.zeros((bp, PACK), jnp.float32)
    u0 = u0.at[:B, U1_OFF:U1_OFF + NUM_HIDDEN].set(u1_2)
    u0 = u0.at[:B, U2_OFF:U2_OFF + NUM_OUTPUT].set(u2_2)

    # --- Packed coupling weight (rows = source lanes, cols = target lanes):
    #   wbig[u2 lanes, u1 lanes] = W2^T   (recurrent W2 @ s2 drive into hidden)
    #   wbig[u1 lanes, u2 lanes] = W2     (feedforward s1 @ W2 drive into output)
    # All padded rows/cols stay zero so nothing leaks into the live lanes.
    wbig = jnp.zeros((PACK, PACK), jnp.float32)
    wbig = wbig.at[U2_OFF:U2_OFF + NUM_OUTPUT,
                   U1_OFF:U1_OFF + NUM_HIDDEN].set(w2f.T)
    wbig = wbig.at[U1_OFF:U1_OFF + NUM_HIDDEN,
                   U2_OFF:U2_OFF + NUM_OUTPUT].set(w2f)
    if use_bf16_matmul:
        # Optional v6e/v7x fast path: bf16 MXU operands, f32 state/accumulation.
        wbig = wbig.astype(jnp.bfloat16)

    # Full unroll only when the block is register-sized; partial unroll keeps
    # u1/u2 chain overlap for big blocks without vreg-spill pressure.
    unroll = True if bb <= 128 else 2
    kernel = functools.partial(_ep_settle_kernel, steps=int(steps_free),
                               step_size=float(step_size), unroll=unroll)

    if nb == 1:
        # Single block: no grid, no pipeline prologue/epilogue, whole arrays
        # placed directly in VMEM.
        vmem = pl.BlockSpec(memory_space=pltpu.MemorySpace.VMEM)
        y_full = pl.pallas_call(
            kernel,
            out_shape=jax.ShapeDtypeStruct((bp, PACK), jnp.float32),
            in_specs=[vmem, vmem, vmem],
            out_specs=vmem,
        )(c, wbig, u0)
    else:
        y_full = pl.pallas_call(
            kernel,
            out_shape=jax.ShapeDtypeStruct((bp, PACK), jnp.float32),
            grid=(nb,),
            in_specs=[
                pl.BlockSpec((bb, PACK), lambda i: (i, 0)),
                pl.BlockSpec((PACK, PACK), lambda i: (0, 0)),
                pl.BlockSpec((bb, PACK), lambda i: (i, 0)),
            ],
            out_specs=pl.BlockSpec((bb, PACK), lambda i: (i, 0)),
            compiler_params=pltpu.CompilerParams(
                dimension_semantics=("parallel",)),   # even grid -> v7x 2-TC split
        )(c, wbig, u0)

    y = y_full[:B, U2_OFF:U2_OFF + NUM_OUTPUT]
    return y.reshape(NUM_OUTPUT) if single else y


def _reference_forward(x, w1, w2, b1, b2, u1, u2, steps, step_size):
    """Pure-JAX reference of the same free-phase settle dynamics (batched)."""
    sig = lambda u: 1.0 / (1.0 + jnp.exp(-u))
    xw1 = x @ w1
    for _ in range(steps):
        s1 = sig(u1)
        s2 = sig(u2)
        g1 = u1 - (0.5 * xw1 + s2 @ w2.T + b1) * s1 * (1.0 - s1)
        g2 = u2 - (s1 @ w2 + b2) * s2 * (1.0 - s2)
        u1 = u1 - step_size * g1
        u2 = u2 - step_size * g2
    return sig(u2)


if __name__ == "__main__":
    key = jax.random.PRNGKey(0)
    k_w1, k_w2, k_b1, k_b2, k_x, k_u1, k_u2 = jax.random.split(key, 7)

    # Parameters matching nn.init.normal_ shapes in __init__.
    w1 = jax.random.normal(k_w1, (NUM_INPUT, NUM_HIDDEN), jnp.float32)
    w2 = jax.random.normal(k_w2, (NUM_HIDDEN, NUM_OUTPUT), jnp.float32)
    b1 = jax.random.normal(k_b1, (NUM_HIDDEN,), jnp.float32)
    b2 = jax.random.normal(k_b2, (NUM_OUTPUT,), jnp.float32)
    params = {"steps_free": 20, "step_size": 0.5}

    # 1) Single example: exactly the torch forward() shapes.
    x1 = jax.random.uniform(k_x, (NUM_INPUT,), jnp.float32)
    u1_1 = jax.random.normal(k_u1, (NUM_HIDDEN,), jnp.float32)
    u2_1 = jax.random.normal(k_u2, (NUM_OUTPUT,), jnp.float32)
    y1 = jax.block_until_ready(equilibrium_propagation_forward(
        x1, w1, w2, b1, b2, u1_1, u2_1,
        steps_free=params["steps_free"], step_size=params["step_size"]))
    y1_ref = _reference_forward(x1[None], w1, w2, b1, b2, u1_1[None], u2_1[None],
                                params["steps_free"], params["step_size"])[0]
    np.testing.assert_allclose(np.asarray(y1), np.asarray(y1_ref),
                               rtol=5e-3, atol=5e-3)

    # 2) Small batch: gridless whole-array VMEM path (packed 128-lane state).
    B = 8
    xb = jax.random.uniform(k_x, (B, NUM_INPUT), jnp.float32)
    u1b = jax.random.normal(k_u1, (B, NUM_HIDDEN), jnp.float32)
    u2b = jax.random.normal(k_u2, (B, NUM_OUTPUT), jnp.float32)
    yb = jax.block_until_ready(equilibrium_propagation_forward(
        xb, w1, w2, b1, b2, u1b, u2b,
        steps_free=params["steps_free"], step_size=params["step_size"]))
    yb_ref = _reference_forward(xb, w1, w2, b1, b2, u1b, u2b,
                                params["steps_free"], params["step_size"])
    np.testing.assert_allclose(np.asarray(yb), np.asarray(yb_ref),
                               rtol=5e-3, atol=5e-3)

    # 3) Larger batch exercising the batch-tiled grid path: B=1200, block_b=512
    #    -> 3 blocks rounded up to an EVEN grid of 4 blocks of 304 rows
    #    (dimension_semantics=("parallel",) -> balanced 2-TC split on v7x),
    #    with padded rows sliced off.
    B2 = 1200
    xg = jax.random.uniform(k_x, (B2, NUM_INPUT), jnp.float32)
    u1g = jax.random.normal(k_u1, (B2, NUM_HIDDEN), jnp.float32)
    u2g = jax.random.normal(k_u2, (B2, NUM_OUTPUT), jnp.float32)
    yg = jax.block_until_ready(equilibrium_propagation_forward(
        xg, w1, w2, b1, b2, u1g, u2g,
        steps_free=params["steps_free"], step_size=params["step_size"],
        block_b=512))
    yg_ref = _reference_forward(xg, w1, w2, b1, b2, u1g, u2g,
                                params["steps_free"], params["step_size"])
    np.testing.assert_allclose(np.asarray(yg), np.asarray(yg_ref),
                               rtol=5e-3, atol=5e-3)

    print("KERNEL_OK")
</pallas_src>

<mosaic_0001>
module attributes {stable_mosaic.version = 11 : i64} {
  func.func @_ep_settle_kernel(%arg0: memref<8x128xf32, #tpu.memory_space<vmem>>, %arg1: memref<128x128xf32, #tpu.memory_space<vmem>>, %arg2: memref<8x128xf32, #tpu.memory_space<vmem>>, %arg3: memref<8x128xf32, #tpu.memory_space<vmem>>) attributes {dimension_semantics = [], scalar_prefetch = 0 : i64, scratch_operands = 0 : i64, tpu.core_type = #tpu.core_type<tc>} {
    %c0 = arith.constant 0 : index
    %c0_0 = arith.constant 0 : index
    %0 = vector.load %arg0[%c0, %c0_0] : memref<8x128xf32, #tpu.memory_space<vmem>>, vector<8x128xf32>
    %c0_1 = arith.constant 0 : index
    %c0_2 = arith.constant 0 : index
    %1 = vector.load %arg1[%c0_1, %c0_2] : memref<128x128xf32, #tpu.memory_space<vmem>>, vector<128x128xf32>
    %c0_3 = arith.constant 0 : index
    %c0_4 = arith.constant 0 : index
    %2 = vector.load %arg2[%c0_3, %c0_4] : memref<8x128xf32, #tpu.memory_space<vmem>>, vector<8x128xf32>
    %cst = arith.constant 5.000000e-01 : f32
    %cst_5 = arith.constant 5.000000e-01 : f32
    %c0_i32 = arith.constant 0 : i32
    %cst_6 = arith.constant 5.000000e-01 : f32
    %3 = vector.broadcast %cst_6 : f32 to vector<8x128xf32>
    %4 = arith.mulf %3, %2 : vector<8x128xf32>
    %5 = math.tanh %4 : vector<8x128xf32>
    %cst_7 = arith.constant 1.000000e+00 : f32
    %6 = vector.broadcast %cst_7 : f32 to vector<8x128xf32>
    %7 = arith.addf %5, %6 : vector<8x128xf32>
    %cst_8 = arith.constant 5.000000e-01 : f32
    %8 = vector.broadcast %cst_8 : f32 to vector<8x128xf32>
    %9 = arith.mulf %8, %7 : vector<8x128xf32>
    %cst_9 = arith.constant 1.000000e+00 : f32
    %10 = vector.broadcast %cst_9 : f32 to vector<8x128xf32>
    %11 = arith.subf %10, %9 : vector<8x128xf32>
    %12 = arith.mulf %9, %11 : vector<8x128xf32>
    %cst_10 = arith.constant dense<0.000000e+00> : vector<8x128xf32>
    %13 = tpu.matmul %9, %1, %cst_10 {dimension_numbers = #tpu.dot_dimension_numbers<[1], [0], [0], [1], [0, 0, 1, 1], [], []>} : vector<8x128xf32>, vector<128x128xf32>, vector<8x128xf32> -> vector<8x128xf32>
    %14 = arith.addf %13, %0 : vector<8x128xf32>
    %15 = vector.broadcast %cst : f32 to vector<8x128xf32>
    %16 = arith.mulf %15, %2 : vector<8x128xf32>
    %17 = arith.mulf %14, %12 : vector<8x128xf32>
    %18 = vector.broadcast %cst_5 : f32 to vector<8x128xf32>
    %19 = arith.mulf %18, %17 : vector<8x128xf32>
    %20 = arith.addf %16, %19 : vector<8x128xf32>
    %c1_i32 = arith.constant 1 : i32
    %cst_11 = arith.constant 5.000000e-01 : f32
    %21 = vector.broadcast %cst_11 : f32 to vector<8x128xf32>
    %22 = arith.mulf %21, %20 : vector<8x128xf32>
    %23 = math.tanh %22 : vector<8x128xf32>
    %cst_12 = arith.constant 1.000000e+00 : f32
    %24 = vector.broadcast %cst_12 : f32 to vector<8x128xf32>
    %25 = arith.addf %23, %24 : vector<8x128xf32>
    %cst_13 = arith.constant 5.000000e-01 : f32
    %26 = vector.broadcast %cst_13 : f32 to vector<8x128xf32>
    %27 = arith.mulf %26, %25 : vector<8x128xf32>
    %cst_14 = arith.constant 1.000000e+00 : f32
    %28 = vector.broadcast %cst_14 : f32 to vector<8x128xf32>
    %29 = arith.subf %28, %27 : vector<8x128xf32>
    %30 = arith.mulf %27, %29 : vector<8x128xf32>
    %cst_15 = arith.constant dense<0.000000e+00> : vector<8x128xf32>
    %31 = tpu.matmul %27, %1, %cst_15 {dimension_numbers = #tpu.dot_dimension_numbers<[1], [0], [0], [1], [0, 0, 1, 1], [], []>} : vector<8x128xf32>, vector<128x128xf32>, vector<8x128xf32> -> vector<8x128xf32>
    %32 = arith.addf %31, %0 : vector<8x128xf32>
    %33 = vector.broadcast %cst : f32 to vector<8x128xf32>
    %34 = arith.mulf %33, %20 : vector<8x128xf32>
    %35 = arith.mulf %32, %30 : vector<8x128xf32>
    %36 = vector.broadcast %cst_5 : f32 to vector<8x128xf32>
    %37 = arith.mulf %36, %35 : vector<8x128xf32>
    %38 = arith.addf %34, %37 : vector<8x128xf32>
    %c2_i32 = arith.constant 2 : i32
    %cst_16 = arith.constant 5.000000e-01 : f32
    %39 = vector.broadcast %cst_16 : f32 to vector<8x128xf32>
    %40 = arith.mulf %39, %38 : vector<8x128xf32>
    %41 = math.tanh %40 : vector<8x128xf32>
    %cst_17 = arith.constant 1.000000e+00 : f32
    %42 = vector.broadcast %cst_17 : f32 to vector<8x128xf32>
    %43 = arith.addf %41, %42 : vector<8x128xf32>
    %cst_18 = arith.constant 5.000000e-01 : f32
    %44 = vector.broadcast %cst_18 : f32 to vector<8x128xf32>
    %45 = arith.mulf %44, %43 : vector<8x128xf32>
    %cst_19 = arith.constant 1.000000e+00 : f32
    %46 = vector.broadcast %cst_19 : f32 to vector<8x128xf32>
    %47 = arith.subf %46, %45 : vector<8x128xf32>
    %48 = arith.mulf %45, %47 : vector<8x128xf32>
    %cst_20 = arith.constant dense<0.000000e+00> : vector<8x128xf32>
    %49 = tpu.matmul %45, %1, %cst_20 {dimension_numbers = #tpu.dot_dimension_numbers<[1], [0], [0], [1], [0, 0, 1, 1], [], []>} : vector<8x128xf32>, vector<128x128xf32>, vector<8x128xf32> -> vector<8x128xf32>
    %50 = arith.addf %49, %0 : vector<8x128xf32>
    %51 = vector.broadcast %cst : f32 to vector<8x128xf32>
    %52 = arith.mulf %51, %38 : vector<8x128xf32>
    %53 = arith.mulf %50, %48 : vector<8x128xf32>
    %54 = vector.broadcast %cst_5 : f32 to vector<8x128xf32>
    %55 = arith.mulf %54, %53 : vector<8x128xf32>
    %56 = arith.addf %52, %55 : vector<8x128xf32>
    %c3_i32 = arith.constant 3 : i32
    %cst_21 = arith.constant 5.000000e-01 : f32
    %57 = vector.broadcast %cst_21 : f32 to vector<8x128xf32>
    %58 = arith.mulf %57, %56 : vector<8x128xf32>
    %59 = math.tanh %58 : vector<8x128xf32>
    %cst_22 = arith.constant 1.000000e+00 : f32
    %60 = vector.broadcast %cst_22 : f32 to vector<8x128xf32>
    %61 = arith.addf %59, %60 : vector<8x128xf32>
    %cst_23 = arith.constant 5.000000e-01 : f32
    %62 = vector.broadcast %cst_23 : f32 to vector<8x128xf32>
    %63 = arith.mulf %62, %61 : vector<8x128xf32>
    %cst_24 = arith.constant 1.000000e+00 : f32
    %64 = vector.broadcast %cst_24 : f32 to vector<8x128xf32>
    %65 = arith.subf %64, %63 : vector<8x128xf32>
    %66 = arith.mulf %63, %65 : vector<8x128xf32>
    %cst_25 = arith.constant dense<0.000000e+00> : vector<8x128xf32>
    %67 = tpu.matmul %63, %1, %cst_25 {dimension_numbers = #tpu.dot_dimension_numbers<[1], [0], [0], [1], [0, 0, 1, 1], [], []>} : vector<8x128xf32>, vector<128x128xf32>, vector<8x128xf32> -> vector<8x128xf32>
    %68 = arith.addf %67, %0 : vector<8x128xf32>
    %69 = vector.broadcast %cst : f32 to vector<8x128xf32>
    %70 = arith.mulf %69, %56 : vector<8x128xf32>
    %71 = arith.mulf %68, %66 : vector<8x128xf32>
    %72 = vector.broadcast %cst_5 : f32 to vector<8x128xf32>
    %73 = arith.mulf %72, %71 : vector<8x128xf32>
    %74 = arith.addf %70, %73 : vector<8x128xf32>
    %c4_i32 = arith.constant 4 : i32
    %cst_26 = arith.constant 5.000000e-01 : f32
    %75 = vector.broadcast %cst_26 : f32 to vector<8x128xf32>
    %76 = arith.mulf %75, %74 : vector<8x128xf32>
    %77 = math.tanh %76 : vector<8x128xf32>
    %cst_27 = arith.constant 1.000000e+00 : f32
    %78 = vector.broadcast %cst_27 : f32 to vector<8x128xf32>
    %79 = arith.addf %77, %78 : vector<8x128xf32>
    %cst_28 = arith.constant 5.000000e-01 : f32
    %80 = vector.broadcast %cst_28 : f32 to vector<8x128xf32>
    %81 = arith.mulf %80, %79 : vector<8x128xf32>
    %cst_29 = arith.constant 1.000000e+00 : f32
    %82 = vector.broadcast %cst_29 : f32 to vector<8x128xf32>
    %83 = arith.subf %82, %81 : vector<8x128xf32>
    %84 = arith.mulf %81, %83 : vector<8x128xf32>
    %cst_30 = arith.constant dense<0.000000e+00> : vector<8x128xf32>
    %85 = tpu.matmul %81, %1, %cst_30 {dimension_numbers = #tpu.dot_dimension_numbers<[1], [0], [0], [1], [0, 0, 1, 1], [], []>} : vector<8x128xf32>, vector<128x128xf32>, vector<8x128xf32> -> vector<8x128xf32>
    %86 = arith.addf %85, %0 : vector<8x128xf32>
    %87 = vector.broadcast %cst : f32 to vector<8x128xf32>
    %88 = arith.mulf %87, %74 : vector<8x128xf32>
    %89 = arith.mulf %86, %84 : vector<8x128xf32>
    %90 = vector.broadcast %cst_5 : f32 to vector<8x128xf32>
    %91 = arith.mulf %90, %89 : vector<8x128xf32>
    %92 = arith.addf %88, %91 : vector<8x128xf32>
    %c5_i32 = arith.constant 5 : i32
    %cst_31 = arith.constant 5.000000e-01 : f32
    %93 = vector.broadcast %cst_31 : f32 to vector<8x128xf32>
    %94 = arith.mulf %93, %92 : vector<8x128xf32>
    %95 = math.tanh %94 : vector<8x128xf32>
    %cst_32 = arith.constant 1.000000e+00 : f32
    %96 = vector.broadcast %cst_32 : f32 to vector<8x128xf32>
    %97 = arith.addf %95, %96 : vector<8x128xf32>
    %cst_33 = arith.constant 5.000000e-01 : f32
    %98 = vector.broadcast %cst_33 : f32 to vector<8x128xf32>
    %99 = arith.mulf %98, %97 : vector<8x128xf32>
    %cst_34 = arith.constant 1.000000e+00 : f32
    %100 = vector.broadcast %cst_34 : f32 to vector<8x128xf32>
    %101 = arith.subf %100, %99 : vector<8x128xf32>
    %102 = arith.mulf %99, %101 : vector<8x128xf32>
    %cst_35 = arith.constant dense<0.000000e+00> : vector<8x128xf32>
    %103 = tpu.matmul %99, %1, %cst_35 {dimension_numbers = #tpu.dot_dimension_numbers<[1], [0], [0], [1], [0, 0, 1, 1], [], []>} : vector<8x128xf32>, vector<128x128xf32>, vector<8x128xf32> -> vector<8x128xf32>
    %104 = arith.addf %103, %0 : vector<8x128xf32>
    %105 = vector.broadcast %cst : f32 to vector<8x128xf32>
    %106 = arith.mulf %105, %92 : vector<8x128xf32>
    %107 = arith.mulf %104, %102 : vector<8x128xf32>
    %108 = vector.broadcast %cst_5 : f32 to vector<8x128xf32>
    %109 = arith.mulf %108, %107 : vector<8x128xf32>
    %110 = arith.addf %106, %109 : vector<8x128xf32>
    %c6_i32 = arith.constant 6 : i32
    %cst_36 = arith.constant 5.000000e-01 : f32
    %111 = vector.broadcast %cst_36 : f32 to vector<8x128xf32>
    %112 = arith.mulf %111, %110 : vector<8x128xf32>
    %113 = math.tanh %112 : vector<8x128xf32>
    %cst_37 = arith.constant 1.000000e+00 : f32
    %114 = vector.broadcast %cst_37 : f32 to vector<8x128xf32>
    %115 = arith.addf %113, %114 : vector<8x128xf32>
    %cst_38 = arith.constant 5.000000e-01 : f32
    %116 = vector.broadcast %cst_38 : f32 to vector<8x128xf32>
    %117 = arith.mulf %116, %115 : vector<8x128xf32>
    %cst_39 = arith.constant 1.000000e+00 : f32
    %118 = vector.broadcast %cst_39 : f32 to vector<8x128xf32>
    %119 = arith.subf %118, %117 : vector<8x128xf32>
    %120 = arith.mulf %117, %119 : vector<8x128xf32>
    %cst_40 = arith.constant dense<0.000000e+00> : vector<8x128xf32>
    %121 = tpu.matmul %117, %1, %cst_40 {dimension_numbers = #tpu.dot_dimension_numbers<[1], [0], [0], [1], [0, 0, 1, 1], [], []>} : vector<8x128xf32>, vector<128x128xf32>, vector<8x128xf32> -> vector<8x128xf32>
    %122 = arith.addf %121, %0 : vector<8x128xf32>
    %123 = vector.broadcast %cst : f32 to vector<8x128xf32>
    %124 = arith.mulf %123, %110 : vector<8x128xf32>
    %125 = arith.mulf %122, %120 : vector<8x128xf32>
    %126 = vector.broadcast %cst_5 : f32 to vector<8x128xf32>
    %127 = arith.mulf %126, %125 : vector<8x128xf32>
    %128 = arith.addf %124, %127 : vector<8x128xf32>
    %c7_i32 = arith.constant 7 : i32
    %cst_41 = arith.constant 5.000000e-01 : f32
    %129 = vector.broadcast %cst_41 : f32 to vector<8x128xf32>
    %130 = arith.mulf %129, %128 : vector<8x128xf32>
    %131 = math.tanh %130 : vector<8x128xf32>
    %cst_42 = arith.constant 1.000000e+00 : f32
    %132 = vector.broadcast %cst_42 : f32 to vector<8x128xf32>
    %133 = arith.addf %131, %132 : vector<8x128xf32>
    %cst_43 = arith.constant 5.000000e-01 : f32
    %134 = vector.broadcast %cst_43 : f32 to vector<8x128xf32>
    %135 = arith.mulf %134, %133 : vector<8x128xf32>
    %cst_44 = arith.constant 1.000000e+00 : f32
    %136 = vector.broadcast %cst_44 : f32 to vector<8x128xf32>
    %137 = arith.subf %136, %135 : vector<8x128xf32>
    %138 = arith.mulf %135, %137 : vector<8x128xf32>
    %cst_45 = arith.constant dense<0.000000e+00> : vector<8x128xf32>
    %139 = tpu.matmul %135, %1, %cst_45 {dimension_numbers = #tpu.dot_dimension_numbers<[1], [0], [0], [1], [0, 0, 1, 1], [], []>} : vector<8x128xf32>, vector<128x128xf32>, vector<8x128xf32> -> vector<8x128xf32>
    %140 = arith.addf %139, %0 : vector<8x128xf32>
    %141 = vector.broadcast %cst : f32 to vector<8x128xf32>
    %142 = arith.mulf %141, %128 : vector<8x128xf32>
    %143 = arith.mulf %140, %138 : vector<8x128xf32>
    %144 = vector.broadcast %cst_5 : f32 to vector<8x128xf32>
    %145 = arith.mulf %144, %143 : vector<8x128xf32>
    %146 = arith.addf %142, %145 : vector<8x128xf32>
    %c8_i32 = arith.constant 8 : i32
    %cst_46 = arith.constant 5.000000e-01 : f32
    %147 = vector.broadcast %cst_46 : f32 to vector<8x128xf32>
    %148 = arith.mulf %147, %146 : vector<8x128xf32>
    %149 = math.tanh %148 : vector<8x128xf32>
    %cst_47 = arith.constant 1.000000e+00 : f32
    %150 = vector.broadcast %cst_47 : f32 to vector<8x128xf32>
    %151 = arith.addf %149, %150 : vector<8x128xf32>
    %cst_48 = arith.constant 5.000000e-01 : f32
    %152 = vector.broadcast %cst_48 : f32 to vector<8x128xf32>
    %153 = arith.mulf %152, %151 : vector<8x128xf32>
    %cst_49 = arith.constant 1.000000e+00 : f32
    %154 = vector.broadcast %cst_49 : f32 to vector<8x128xf32>
    %155 = arith.subf %154, %153 : vector<8x128xf32>
    %156 = arith.mulf %153, %155 : vector<8x128xf32>
    %cst_50 = arith.constant dense<0.000000e+00> : vector<8x128xf32>
    %157 = tpu.matmul %153, %1, %cst_50 {dimension_numbers = #tpu.dot_dimension_numbers<[1], [0], [0], [1], [0, 0, 1, 1], [], []>} : vector<8x128xf32>, vector<128x128xf32>, vector<8x128xf32> -> vector<8x128xf32>
    %158 = arith.addf %157, %0 : vector<8x128xf32>
    %159 = vector.broadcast %cst : f32 to vector<8x128xf32>
    %160 = arith.mulf %159, %146 : vector<8x128xf32>
    %161 = arith.mulf %158, %156 : vector<8x128xf32>
    %162 = vector.broadcast %cst_5 : f32 to vector<8x128xf32>
    %163 = arith.mulf %162, %161 : vector<8x128xf32>
    %164 = arith.addf %160, %163 : vector<8x128xf32>
    %c9_i32 = arith.constant 9 : i32
    %cst_51 = arith.constant 5.000000e-01 : f32
    %165 = vector.broadcast %cst_51 : f32 to vector<8x128xf32>
    %166 = arith.mulf %165, %164 : vector<8x128xf32>
    %167 = math.tanh %166 : vector<8x128xf32>
    %cst_52 = arith.constant 1.000000e+00 : f32
    %168 = vector.broadcast %cst_52 : f32 to vector<8x128xf32>
    %169 = arith.addf %167, %168 : vector<8x128xf32>
    %cst_53 = arith.constant 5.000000e-01 : f32
    %170 = vector.broadcast %cst_53 : f32 to vector<8x128xf32>
    %171 = arith.mulf %170, %169 : vector<8x128xf32>
    %cst_54 = arith.constant 1.000000e+00 : f32
    %172 = vector.broadcast %cst_54 : f32 to vector<8x128xf32>
    %173 = arith.subf %172, %171 : vector<8x128xf32>
    %174 = arith.mulf %171, %173 : vector<8x128xf32>
    %cst_55 = arith.constant dense<0.000000e+00> : vector<8x128xf32>
    %175 = tpu.matmul %171, %1, %cst_55 {dimension_numbers = #tpu.dot_dimension_numbers<[1], [0], [0], [1], [0, 0, 1, 1], [], []>} : vector<8x128xf32>, vector<128x128xf32>, vector<8x128xf32> -> vector<8x128xf32>
    %176 = arith.addf %175, %0 : vector<8x128xf32>
    %177 = vector.broadcast %cst : f32 to vector<8x128xf32>
    %178 = arith.mulf %177, %164 : vector<8x128xf32>
    %179 = arith.mulf %176, %174 : vector<8x128xf32>
    %180 = vector.broadcast %cst_5 : f32 to vector<8x128xf32>
    %181 = arith.mulf %180, %179 : vector<8x128xf32>
    %182 = arith.addf %178, %181 : vector<8x128xf32>
    %c10_i32 = arith.constant 10 : i32
    %cst_56 = arith.constant 5.000000e-01 : f32
    %183 = vector.broadcast %cst_56 : f32 to vector<8x128xf32>
    %184 = arith.mulf %183, %182 : vector<8x128xf32>
    %185 = math.tanh %184 : vector<8x128xf32>
    %cst_57 = arith.constant 1.000000e+00 : f32
    %186 = vector.broadcast %cst_57 : f32 to vector<8x128xf32>
    %187 = arith.addf %185, %186 : vector<8x128xf32>
    %cst_58 = arith.constant 5.000000e-01 : f32
    %188 = vector.broadcast %cst_58 : f32 to vector<8x128xf32>
    %189 = arith.mulf %188, %187 : vector<8x128xf32>
    %cst_59 = arith.constant 1.000000e+00 : f32
    %190 = vector.broadcast %cst_59 : f32 to vector<8x128xf32>
    %191 = arith.subf %190, %189 : vector<8x128xf32>
    %192 = arith.mulf %189, %191 : vector<8x128xf32>
    %cst_60 = arith.constant dense<0.000000e+00> : vector<8x128xf32>
    %193 = tpu.matmul %189, %1, %cst_60 {dimension_numbers = #tpu.dot_dimension_numbers<[1], [0], [0], [1], [0, 0, 1, 1], [], []>} : vector<8x128xf32>, vector<128x128xf32>, vector<8x128xf32> -> vector<8x128xf32>
    %194 = arith.addf %193, %0 : vector<8x128xf32>
    %195 = vector.broadcast %cst : f32 to vector<8x128xf32>
    %196 = arith.mulf %195, %182 : vector<8x128xf32>
    %197 = arith.mulf %194, %192 : vector<8x128xf32>
    %198 = vector.broadcast %cst_5 : f32 to vector<8x128xf32>
    %199 = arith.mulf %198, %197 : vector<8x128xf32>
    %200 = arith.addf %196, %199 : vector<8x128xf32>
    %c11_i32 = arith.constant 11 : i32
    %cst_61 = arith.constant 5.000000e-01 : f32
    %201 = vector.broadcast %cst_61 : f32 to vector<8x128xf32>
    %202 = arith.mulf %201, %200 : vector<8x128xf32>
    %203 = math.tanh %202 : vector<8x128xf32>
    %cst_62 = arith.constant 1.000000e+00 : f32
    %204 = vector.broadcast %cst_62 : f32 to vector<8x128xf32>
    %205 = arith.addf %203, %204 : vector<8x128xf32>
    %cst_63 = arith.constant 5.000000e-01 : f32
    %206 = vector.broadcast %cst_63 : f32 to vector<8x128xf32>
    %207 = arith.mulf %206, %205 : vector<8x128xf32>
    %cst_64 = arith.constant 1.000000e+00 : f32
    %208 = vector.broadcast %cst_64 : f32 to vector<8x128xf32>
    %209 = arith.subf %208, %207 : vector<8x128xf32>
    %210 = arith.mulf %207, %209 : vector<8x128xf32>
    %cst_65 = arith.constant dense<0.000000e+00> : vector<8x128xf32>
    %211 = tpu.matmul %207, %1, %cst_65 {dimension_numbers = #tpu.dot_dimension_numbers<[1], [0], [0], [1], [0, 0, 1, 1], [], []>} : vector<8x128xf32>, vector<128x128xf32>, vector<8x128xf32> -> vector<8x128xf32>
    %212 = arith.addf %211, %0 : vector<8x128xf32>
    %213 = vector.broadcast %cst : f32 to vector<8x128xf32>
    %214 = arith.mulf %213, %200 : vector<8x128xf32>
    %215 = arith.mulf %212, %210 : vector<8x128xf32>
    %216 = vector.broadcast %cst_5 : f32 to vector<8x128xf32>
    %217 = arith.mulf %216, %215 : vector<8x128xf32>
    %218 = arith.addf %214, %217 : vector<8x128xf32>
    %c12_i32 = arith.constant 12 : i32
    %cst_66 = arith.constant 5.000000e-01 : f32
    %219 = vector.broadcast %cst_66 : f32 to vector<8x128xf32>
    %220 = arith.mulf %219, %218 : vector<8x128xf32>
    %221 = math.tanh %220 : vector<8x128xf32>
    %cst_67 = arith.constant 1.000000e+00 : f32
    %222 = vector.broadcast %cst_67 : f32 to vector<8x128xf32>
    %223 = arith.addf %221, %222 : vector<8x128xf32>
    %cst_68 = arith.constant 5.000000e-01 : f32
    %224 = vector.broadcast %cst_68 : f32 to vector<8x128xf32>
    %225 = arith.mulf %224, %223 : vector<8x128xf32>
    %cst_69 = arith.constant 1.000000e+00 : f32
    %226 = vector.broadcast %cst_69 : f32 to vector<8x128xf32>
    %227 = arith.subf %226, %225 : vector<8x128xf32>
    %228 = arith.mulf %225, %227 : vector<8x128xf32>
    %cst_70 = arith.constant dense<0.000000e+00> : vector<8x128xf32>
    %229 = tpu.matmul %225, %1, %cst_70 {dimension_numbers = #tpu.dot_dimension_numbers<[1], [0], [0], [1], [0, 0, 1, 1], [], []>} : vector<8x128xf32>, vector<128x128xf32>, vector<8x128xf32> -> vector<8x128xf32>
    %230 = arith.addf %229, %0 : vector<8x128xf32>
    %231 = vector.broadcast %cst : f32 to vector<8x128xf32>
    %232 = arith.mulf %231, %218 : vector<8x128xf32>
    %233 = arith.mulf %230, %228 : vector<8x128xf32>
    %234 = vector.broadcast %cst_5 : f32 to vector<8x128xf32>
    %235 = arith.mulf %234, %233 : vector<8x128xf32>
    %236 = arith.addf %232, %235 : vector<8x128xf32>
    %c13_i32 = arith.constant 13 : i32
    %cst_71 = arith.constant 5.000000e-01 : f32
    %237 = vector.broadcast %cst_71 : f32 to vector<8x128xf32>
    %238 = arith.mulf %237, %236 : vector<8x128xf32>
    %239 = math.tanh %238 : vector<8x128xf32>
    %cst_72 = arith.constant 1.000000e+00 : f32
    %240 = vector.broadcast %cst_72 : f32 to vector<8x128xf32>
    %241 = arith.addf %239, %240 : vector<8x128xf32>
    %cst_73 = arith.constant 5.000000e-01 : f32
    %242 = vector.broadcast %cst_73 : f32 to vector<8x128xf32>
    %243 = arith.mulf %242, %241 : vector<8x128xf32>
    %cst_74 = arith.constant 1.000000e+00 : f32
    %244 = vector.broadcast %cst_74 : f32 to vector<8x128xf32>
    %245 = arith.subf %244, %243 : vector<8x128xf32>
    %246 = arith.mulf %243, %245 : vector<8x128xf32>
    %cst_75 = arith.constant dense<0.000000e+00> : vector<8x128xf32>
    %247 = tpu.matmul %243, %1, %cst_75 {dimension_numbers = #tpu.dot_dimension_numbers<[1], [0], [0], [1], [0, 0, 1, 1], [], []>} : vector<8x128xf32>, vector<128x128xf32>, vector<8x128xf32> -> vector<8x128xf32>
    %248 = arith.addf %247, %0 : vector<8x128xf32>
    %249 = vector.broadcast %cst : f32 to vector<8x128xf32>
    %250 = arith.mulf %249, %236 : vector<8x128xf32>
    %251 = arith.mulf %248, %246 : vector<8x128xf32>
    %252 = vector.broadcast %cst_5 : f32 to vector<8x128xf32>
    %253 = arith.mulf %252, %251 : vector<8x128xf32>
    %254 = arith.addf %250, %253 : vector<8x128xf32>
    %c14_i32 = arith.constant 14 : i32
    %cst_76 = arith.constant 5.000000e-01 : f32
    %255 = vector.broadcast %cst_76 : f32 to vector<8x128xf32>
    %256 = arith.mulf %255, %254 : vector<8x128xf32>
    %257 = math.tanh %256 : vector<8x128xf32>
    %cst_77 = arith.constant 1.000000e+00 : f32
    %258 = vector.broadcast %cst_77 : f32 to vector<8x128xf32>
    %259 = arith.addf %257, %258 : vector<8x128xf32>
    %cst_78 = arith.constant 5.000000e-01 : f32
    %260 = vector.broadcast %cst_78 : f32 to vector<8x128xf32>
    %261 = arith.mulf %260, %259 : vector<8x128xf32>
    %cst_79 = arith.constant 1.000000e+00 : f32
    %262 = vector.broadcast %cst_79 : f32 to vector<8x128xf32>
    %263 = arith.subf %262, %261 : vector<8x128xf32>
    %264 = arith.mulf %261, %263 : vector<8x128xf32>
    %cst_80 = arith.constant dense<0.000000e+00> : vector<8x128xf32>
    %265 = tpu.matmul %261, %1, %cst_80 {dimension_numbers = #tpu.dot_dimension_numbers<[1], [0], [0], [1], [0, 0, 1, 1], [], []>} : vector<8x128xf32>, vector<128x128xf32>, vector<8x128xf32> -> vector<8x128xf32>
    %266 = arith.addf %265, %0 : vector<8x128xf32>
    %267 = vector.broadcast %cst : f32 to vector<8x128xf32>
    %268 = arith.mulf %267, %254 : vector<8x128xf32>
    %269 = arith.mulf %266, %264 : vector<8x128xf32>
    %270 = vector.broadcast %cst_5 : f32 to vector<8x128xf32>
    %271 = arith.mulf %270, %269 : vector<8x128xf32>
    %272 = arith.addf %268, %271 : vector<8x128xf32>
    %c15_i32 = arith.constant 15 : i32
    %cst_81 = arith.constant 5.000000e-01 : f32
    %273 = vector.broadcast %cst_81 : f32 to vector<8x128xf32>
    %274 = arith.mulf %273, %272 : vector<8x128xf32>
    %275 = math.tanh %274 : vector<8x128xf32>
    %cst_82 = arith.constant 1.000000e+00 : f32
    %276 = vector.broadcast %cst_82 : f32 to vector<8x128xf32>
    %277 = arith.addf %275, %276 : vector<8x128xf32>
    %cst_83 = arith.constant 5.000000e-01 : f32
    %278 = vector.broadcast %cst_83 : f32 to vector<8x128xf32>
    %279 = arith.mulf %278, %277 : vector<8x128xf32>
    %cst_84 = arith.constant 1.000000e+00 : f32
    %280 = vector.broadcast %cst_84 : f32 to vector<8x128xf32>
    %281 = arith.subf %280, %279 : vector<8x128xf32>
    %282 = arith.mulf %279, %281 : vector<8x128xf32>
    %cst_85 = arith.constant dense<0.000000e+00> : vector<8x128xf32>
    %283 = tpu.matmul %279, %1, %cst_85 {dimension_numbers = #tpu.dot_dimension_numbers<[1], [0], [0], [1], [0, 0, 1, 1], [], []>} : vector<8x128xf32>, vector<128x128xf32>, vector<8x128xf32> -> vector<8x128xf32>
    %284 = arith.addf %283, %0 : vector<8x128xf32>
    %285 = vector.broadcast %cst : f32 to vector<8x128xf32>
    %286 = arith.mulf %285, %272 : vector<8x128xf32>
    %287 = arith.mulf %284, %282 : vector<8x128xf32>
    %288 = vector.broadcast %cst_5 : f32 to vector<8x128xf32>
    %289 = arith.mulf %288, %287 : vector<8x128xf32>
    %290 = arith.addf %286, %289 : vector<8x128xf32>
    %c16_i32 = arith.constant 16 : i32
    %cst_86 = arith.constant 5.000000e-01 : f32
    %291 = vector.broadcast %cst_86 : f32 to vector<8x128xf32>
    %292 = arith.mulf %291, %290 : vector<8x128xf32>
    %293 = math.tanh %292 : vector<8x128xf32>
    %cst_87 = arith.constant 1.000000e+00 : f32
    %294 = vector.broadcast %cst_87 : f32 to vector<8x128xf32>
    %295 = arith.addf %293, %294 : vector<8x128xf32>
    %cst_88 = arith.constant 5.000000e-01 : f32
    %296 = vector.broadcast %cst_88 : f32 to vector<8x128xf32>
    %297 = arith.mulf %296, %295 : vector<8x128xf32>
    %cst_89 = arith.constant 1.000000e+00 : f32
    %298 = vector.broadcast %cst_89 : f32 to vector<8x128xf32>
    %299 = arith.subf %298, %297 : vector<8x128xf32>
    %300 = arith.mulf %297, %299 : vector<8x128xf32>
    %cst_90 = arith.constant dense<0.000000e+00> : vector<8x128xf32>
    %301 = tpu.matmul %297, %1, %cst_90 {dimension_numbers = #tpu.dot_dimension_numbers<[1], [0], [0], [1], [0, 0, 1, 1], [], []>} : vector<8x128xf32>, vector<128x128xf32>, vector<8x128xf32> -> vector<8x128xf32>
    %302 = arith.addf %301, %0 : vector<8x128xf32>
    %303 = vector.broadcast %cst : f32 to vector<8x128xf32>
    %304 = arith.mulf %303, %290 : vector<8x128xf32>
    %305 = arith.mulf %302, %300 : vector<8x128xf32>
    %306 = vector.broadcast %cst_5 : f32 to vector<8x128xf32>
    %307 = arith.mulf %306, %305 : vector<8x128xf32>
    %308 = arith.addf %304, %307 : vector<8x128xf32>
    %c17_i32 = arith.constant 17 : i32
    %cst_91 = arith.constant 5.000000e-01 : f32
    %309 = vector.broadcast %cst_91 : f32 to vector<8x128xf32>
    %310 = arith.mulf %309, %308 : vector<8x128xf32>
    %311 = math.tanh %310 : vector<8x128xf32>
    %cst_92 = arith.constant 1.000000e+00 : f32
    %312 = vector.broadcast %cst_92 : f32 to vector<8x128xf32>
    %313 = arith.addf %311, %312 : vector<8x128xf32>
    %cst_93 = arith.constant 5.000000e-01 : f32
    %314 = vector.broadcast %cst_93 : f32 to vector<8x128xf32>
    %315 = arith.mulf %314, %313 : vector<8x128xf32>
    %cst_94 = arith.constant 1.000000e+00 : f32
    %316 = vector.broadcast %cst_94 : f32 to vector<8x128xf32>
    %317 = arith.subf %316, %315 : vector<8x128xf32>
    %318 = arith.mulf %315, %317 : vector<8x128xf32>
    %cst_95 = arith.constant dense<0.000000e+00> : vector<8x128xf32>
    %319 = tpu.matmul %315, %1, %cst_95 {dimension_numbers = #tpu.dot_dimension_numbers<[1], [0], [0], [1], [0, 0, 1, 1], [], []>} : vector<8x128xf32>, vector<128x128xf32>, vector<8x128xf32> -> vector<8x128xf32>
    %320 = arith.addf %319, %0 : vector<8x128xf32>
    %321 = vector.broadcast %cst : f32 to vector<8x128xf32>
    %322 = arith.mulf %321, %308 : vector<8x128xf32>
    %323 = arith.mulf %320, %318 : vector<8x128xf32>
    %324 = vector.broadcast %cst_5 : f32 to vector<8x128xf32>
    %325 = arith.mulf %324, %323 : vector<8x128xf32>
    %326 = arith.addf %322, %325 : vector<8x128xf32>
    %c18_i32 = arith.constant 18 : i32
    %cst_96 = arith.constant 5.000000e-01 : f32
    %327 = vector.broadcast %cst_96 : f32 to vector<8x128xf32>
    %328 = arith.mulf %327, %326 : vector<8x128xf32>
    %329 = math.tanh %328 : vector<8x128xf32>
    %cst_97 = arith.constant 1.000000e+00 : f32
    %330 = vector.broadcast %cst_97 : f32 to vector<8x128xf32>
    %331 = arith.addf %329, %330 : vector<8x128xf32>
    %cst_98 = arith.constant 5.000000e-01 : f32
    %332 = vector.broadcast %cst_98 : f32 to vector<8x128xf32>
    %333 = arith.mulf %332, %331 : vector<8x128xf32>
    %cst_99 = arith.constant 1.000000e+00 : f32
    %334 = vector.broadcast %cst_99 : f32 to vector<8x128xf32>
    %335 = arith.subf %334, %333 : vector<8x128xf32>
    %336 = arith.mulf %333, %335 : vector<8x128xf32>
    %cst_100 = arith.constant dense<0.000000e+00> : vector<8x128xf32>
    %337 = tpu.matmul %333, %1, %cst_100 {dimension_numbers = #tpu.dot_dimension_numbers<[1], [0], [0], [1], [0, 0, 1, 1], [], []>} : vector<8x128xf32>, vector<128x128xf32>, vector<8x128xf32> -> vector<8x128xf32>
    %338 = arith.addf %337, %0 : vector<8x128xf32>
    %339 = vector.broadcast %cst : f32 to vector<8x128xf32>
    %340 = arith.mulf %339, %326 : vector<8x128xf32>
    %341 = arith.mulf %338, %336 : vector<8x128xf32>
    %342 = vector.broadcast %cst_5 : f32 to vector<8x128xf32>
    %343 = arith.mulf %342, %341 : vector<8x128xf32>
    %344 = arith.addf %340, %343 : vector<8x128xf32>
    %c19_i32 = arith.constant 19 : i32
    %cst_101 = arith.constant 5.000000e-01 : f32
    %345 = vector.broadcast %cst_101 : f32 to vector<8x128xf32>
    %346 = arith.mulf %345, %344 : vector<8x128xf32>
    %347 = math.tanh %346 : vector<8x128xf32>
    %cst_102 = arith.constant 1.000000e+00 : f32
    %348 = vector.broadcast %cst_102 : f32 to vector<8x128xf32>
    %349 = arith.addf %347, %348 : vector<8x128xf32>
    %cst_103 = arith.constant 5.000000e-01 : f32
    %350 = vector.broadcast %cst_103 : f32 to vector<8x128xf32>
    %351 = arith.mulf %350, %349 : vector<8x128xf32>
    %cst_104 = arith.constant 1.000000e+00 : f32
    %352 = vector.broadcast %cst_104 : f32 to vector<8x128xf32>
    %353 = arith.subf %352, %351 : vector<8x128xf32>
    %354 = arith.mulf %351, %353 : vector<8x128xf32>
    %cst_105 = arith.constant dense<0.000000e+00> : vector<8x128xf32>
    %355 = tpu.matmul %351, %1, %cst_105 {dimension_numbers = #tpu.dot_dimension_numbers<[1], [0], [0], [1], [0, 0, 1, 1], [], []>} : vector<8x128xf32>, vector<128x128xf32>, vector<8x128xf32> -> vector<8x128xf32>
    %356 = arith.addf %355, %0 : vector<8x128xf32>
    %357 = vector.broadcast %cst : f32 to vector<8x128xf32>
    %358 = arith.mulf %357, %344 : vector<8x128xf32>
    %359 = arith.mulf %356, %354 : vector<8x128xf32>
    %360 = vector.broadcast %cst_5 : f32 to vector<8x128xf32>
    %361 = arith.mulf %360, %359 : vector<8x128xf32>
    %362 = arith.addf %358, %361 : vector<8x128xf32>
    %cst_106 = arith.constant 5.000000e-01 : f32
    %363 = vector.broadcast %cst_106 : f32 to vector<8x128xf32>
    %364 = arith.mulf %363, %362 : vector<8x128xf32>
    %365 = math.tanh %364 : vector<8x128xf32>
    %cst_107 = arith.constant 1.000000e+00 : f32
    %366 = vector.broadcast %cst_107 : f32 to vector<8x128xf32>
    %367 = arith.addf %365, %366 : vector<8x128xf32>
    %cst_108 = arith.constant 5.000000e-01 : f32
    %368 = vector.broadcast %cst_108 : f32 to vector<8x128xf32>
    %369 = arith.mulf %368, %367 : vector<8x128xf32>
    %c0_109 = arith.constant 0 : index
    %c0_110 = arith.constant 0 : index
    %370 = vector.load %arg3[%c0_109, %c0_110] : memref<8x128xf32, #tpu.memory_space<vmem>>, vector<8x128xf32>
    tpu.vector_store %arg3[%c0_109, %c0_110], %369 {strides = array<i32>} : memref<8x128xf32, #tpu.memory_space<vmem>>, vector<8x128xf32>,
    return
  }
}

</mosaic_0001>

<llo_original>
// kernel: tpu_custom_call.1
$region0: #{tpu_custom_call.1}
  #allocation0 [shape = 'u32[]', space=smem, size = 0x4, offset = 0x4, fixed_abs, tag = 'smem constant byte address 0x4 - core index']
  #allocation1 [shape = 'u32[72,128]{1,0:T(1,128)}', space=vmem, size = 0x9000, scoped, tag = 'internal scratch']
  %s0 = inlined_call_operand.hbm [shape: f32[8,128], index: 0, kind: input, shape index: {}]
  %s1 = inlined_call_operand.hbm [shape: f32[128,128], index: 1, kind: input, shape index: {}]
  %s2 = inlined_call_operand.hbm [shape: f32[8,128], index: 2, kind: input, shape index: {}]
  %s3 = inlined_call_operand.hbm [shape: f32[8,128], index: 3, kind: output, shape index: {}]
  %s4 = sld [smem:[#allocation0]]
  $region34: #{tpu_custom_call.1} parent=0
    _
  %s6 = ssub.s32 1, %s4
  %s7 = scalar_select 0, %s6, %s4
  $region1: #{tpu_custom_call.1} parent=0
    #allocation2 [shape = 'u8[4096]{0}', space=vmem, size = 0x1000, scoped, tag = 'input window, operand 0, single buffered']
    #allocation3 [shape = 's32[1]{0}', space=sflag, size = 0x4, scoped, tag = 'scoped memory for tpu_custom_call.1']
    #allocation4 [shape = 's32[1]{0}', space=sflag, size = 0x4, scoped, tag = 'scoped memory for tpu_custom_call.1']
    #allocation5 [shape = 'u8[65536]{0}', space=vmem, size = 0x10000, scoped, tag = 'input window, operand 1, single buffered']
    #allocation6 [shape = 's32[1]{0}', space=sflag, size = 0x4, scoped, tag = 'scoped memory for tpu_custom_call.1']
    #allocation7 [shape = 'u8[4096]{0}', space=vmem, size = 0x1000, scoped, tag = 'input window, operand 2, single buffered']
    #allocation8 [shape = 'u8[4096]{0}', space=vmem, size = 0x1000, scoped, tag = 'output window, operand 0, single buffered']
    %8 = vsyncpa [#allocation3], 0
    %9 = vsyncpa [#allocation6], 0
    %10 = vsyncpa [#allocation4], 0
    // Predicated region
    $region2: #{tpu_custom_call.1} parent=1 // pred_check
      _
    $region3: #{tpu_custom_call.1} parent=1 // pred_check_branch
      %12 = sbr.rel (0) target = $region5
    $region4: #{tpu_custom_call.1} parent=1 // pred_region
      %14 = vsyncadd [#allocation3], 0
      %s16 = sshll.u32 %s0, 4
      %s17 = int_to_ptr.hbm [resolvable:$true] %s16
      %s18 = sshll.u32 [#allocation2], 4
      %s19 = int_to_ptr.vmem [resolvable:$true] %s18
      %21 = dma.hbm_to_vmem [thread:$0]  %s17, 128, %s19, [#allocation3]
    $region5: #{tpu_custom_call.1} parent=1 // pred_fallthru
      _
    // Predicated region
    $region6: #{tpu_custom_call.1} parent=1 // pred_check
      _
    $region7: #{tpu_custom_call.1} parent=1 // pred_check_branch
      %23 = sbr.rel (0) target = $region9
    $region8: #{tpu_custom_call.1} parent=1 // pred_region
      %25 = vsyncadd [#allocation6], 0
      %s26 = sshll.u32 %s1, 4
      %s27 = int_to_ptr.hbm [resolvable:$true] %s26
      %s28 = sshll.u32 [#allocation5], 4
      %s29 = int_to_ptr.vmem [resolvable:$true] %s28
      %34 = dma.hbm_to_vmem [thread:$0]  %s27, 2048, %s29, [#allocation6], 128, 128, 8
    $region9: #{tpu_custom_call.1} parent=1 // pred_fallthru
      _
    // Predicated region
    $region10: #{tpu_custom_call.1} parent=1 // pred_check
      _
    $region11: #{tpu_custom_call.1} parent=1 // pred_check_branch
      %36 = sbr.rel (0) target = $region13
    $region12: #{tpu_custom_call.1} parent=1 // pred_region
      %38 = vsyncadd [#allocation6], 0
      %s40 = sshll.u32 %s2, 4
      %s41 = int_to_ptr.hbm [resolvable:$true] %s40
      %s42 = sshll.u32 [#allocation7], 4
      %s43 = int_to_ptr.vmem [resolvable:$true] %s42
      %45 = dma.hbm_to_vmem [thread:$0]  %s41, 128, %s43, [#allocation6]
    $region13: #{tpu_custom_call.1} parent=1 // pred_fallthru
      _
    // Predicated region
    $region14: #{tpu_custom_call.1} parent=1 // pred_check
      _
    $region15: #{tpu_custom_call.1} parent=1 // pred_check_branch
      %47 = sbr.rel (0) target = $region17
    $region16: #{tpu_custom_call.1} parent=1 // pred_region
      %49 = dma.done [#allocation3], 128
    $region17: #{tpu_custom_call.1} parent=1 // pred_fallthru
      _
    // Predicated region
    $region18: #{tpu_custom_call.1} parent=1 // pred_check
      _
    $region19: #{tpu_custom_call.1} parent=1 // pred_check_branch
      %51 = sbr.rel (0) target = $region21
    $region20: #{tpu_custom_call.1} parent=1 // pred_region
      %53 = dma.done [#allocation6], 2048
    $region21: #{tpu_custom_call.1} parent=1 // pred_fallthru
      _
    // Predicated region
    $region22: #{tpu_custom_call.1} parent=1 // pred_check
      _
    $region23: #{tpu_custom_call.1} parent=1 // pred_check_branch
      %55 = sbr.rel (0) target = $region25
    $region24: #{tpu_custom_call.1} parent=1 // pred_region
      %57 = dma.done [#allocation6], 128
    $region25: #{tpu_custom_call.1} parent=1 // pred_fallthru
      _
    %v58 = vld [vmem:[#allocation2] sm:$0xff]
    %v59 = vld [vmem:[#allocation5] sm:$0xff]
    %v60 = vld [vmem:[#allocation5 + $0x8] sm:$0xff]
    %v61 = vld [vmem:[#allocation5 + $0x10] sm:$0xff]
    %v62 = vld [vmem:[#allocation5 + $0x18] sm:$0xff]
    %v63 = vld [vmem:[#allocation5 + $0x20] sm:$0xff]
    %v64 = vld [vmem:[#allocation5 + $0x28] sm:$0xff]
    %v65 = vld [vmem:[#allocation5 + $0x30] sm:$0xff]
    %v66 = vld [vmem:[#allocation5 + $0x38] sm:$0xff]
    %v67 = vld [vmem:[#allocation5 + $0x40] sm:$0xff]
    %v68 = vld [vmem:[#allocation5 + $0x48] sm:$0xff]
    %v69 = vld [vmem:[#allocation5 + $0x50] sm:$0xff]
    %v70 = vld [vmem:[#allocation5 + $0x58] sm:$0xff]
    %v71 = vld [vmem:[#allocation5 + $0x60] sm:$0xff]
    %v72 = vld [vmem:[#allocation5 + $0x68] sm:$0xff]
    %v73 = vld [vmem:[#allocation5 + $0x70] sm:$0xff]
    %v74 = vld [vmem:[#allocation5 + $0x78] sm:$0xff]
    %v75 = vld [vmem:[#allocation7] sm:$0xff]
    %v76 = vmul.f32 %v75, 0.5
    %v77 = vtanh.pop %v76
    %v78 = vadd.f32 %v77, 1.0
    %v79 = vmul.f32 %v78, 0.5
    %v80 = vsub.f32 1.0, %v79
    %v81 = vmul.f32 %v79, %v80
    %82 = vmatpush.msra.mxu0 %v74
    %83 = vmatpush.msra.mxu0 %v73
    %84 = vmatpush.msra.mxu0 %v72
    %85 = vmatpush.msra.mxu0 %v71
    %86 = vmatpush.msra.mxu0 %v70
    %87 = vmatpush.msra.mxu0 %v69
    %88 = vmatpush.msra.mxu0 %v68
    %89 = vmatpush.msra.mxu0 %v67
    %90 = vmatpush.msra.mxu0 %v66
    %91 = vmatpush.msra.mxu0 %v65
    %92 = vmatpush.msra.mxu0 %v64
    %93 = vmatpush.msra.mxu0 %v63
    %94 = vmatpush.msra.mxu0 %v62
    %95 = vmatpush.msra.mxu0 %v61
    %96 = vmatpush.msra.mxu0 %v60
    %97 = vmatpush.msra.mxu0 %v59
    %98 = vmatmul.f32.gmra.mxu0 %v79
    %v99 = vpop.f32.mrf.mxu0
    %v100 = vadd.f32 %v58, %v99
    %101 = vdwg.mxu0
    %v102 = vmul.f32 %v100, %v81
    %v103 = vmul.f32 %v102, 0.5
    %v104 = vadd.f32 %v76, %v103
    %v105 = vmul.f32 %v104, 0.5
    %v106 = vtanh.pop %v105
    %v107 = vadd.f32 %v106, 1.0
    %v108 = vmul.f32 %v107, 0.5
    %v109 = vsub.f32 1.0, %v108
    %v110 = vmul.f32 %v108, %v109
    %111 = vmatpush.msra.mxu0 %v74
    %112 = vmatpush.msra.mxu0 %v73
    %113 = vmatpush.msra.mxu0 %v72
    %114 = vmatpush.msra.mxu0 %v71
    %115 = vmatpush.msra.mxu0 %v70
    %116 = vmatpush.msra.mxu0 %v69
    %117 = vmatpush.msra.mxu0 %v68
    %118 = vmatpush.msra.mxu0 %v67
    %119 = vmatpush.msra.mxu0 %v66
    %120 = vmatpush.msra.mxu0 %v65
    %121 = vmatpush.msra.mxu0 %v64
    %122 = vmatpush.msra.mxu0 %v63
    %123 = vmatpush.msra.mxu0 %v62
    %124 = vmatpush.msra.mxu0 %v61
    %125 = vmatpush.msra.mxu0 %v60
    %126 = vmatpush.msra.mxu0 %v59
    %127 = vmatmul.f32.gmra.mxu0 %v108
    %v128 = vpop.f32.mrf.mxu0
    %v129 = vadd.f32 %v58, %v128
    %130 = vdwg.mxu0
    %v131 = vmul.f32 %v129, %v110
    %v132 = vmul.f32 %v131, 0.5
    %v133 = vadd.f32 %v105, %v132
    %v134 = vmul.f32 %v133, 0.5
    %v135 = vtanh.pop %v134
    %v136 = vadd.f32 %v135, 1.0
    %v137 = vmul.f32 %v136, 0.5
    %v138 = vsub.f32 1.0, %v137
    %v139 = vmul.f32 %v137, %v138
    %140 = vmatpush.msra.mxu0 %v74
    %141 = vmatpush.msra.mxu0 %v73
    %142 = vmatpush.msra.mxu0 %v72
    %143 = vmatpush.msra.mxu0 %v71
    %144 = vmatpush.msra.mxu0 %v70
    %145 = vmatpush.msra.mxu0 %v69
    %146 = vmatpush.msra.mxu0 %v68
    %147 = vmatpush.msra.mxu0 %v67
    %148 = vmatpush.msra.mxu0 %v66
    %149 = vmatpush.msra.mxu0 %v65
    %150 = vmatpush.msra.mxu0 %v64
    %151 = vmatpush.msra.mxu0 %v63
    %152 = vmatpush.msra.mxu0 %v62
    %153 = vmatpush.msra.mxu0 %v61
    %154 = vmatpush.msra.mxu0 %v60
    %155 = vmatpush.msra.mxu0 %v59
    %156 = vmatmul.f32.gmra.mxu0 %v137
    %v157 = vpop.f32.mrf.mxu0
    %v158 = vadd.f32 %v58, %v157
    %159 = vdwg.mxu0
    %v160 = vmul.f32 %v158, %v139
    %v161 = vmul.f32 %v160, 0.5
    %v162 = vadd.f32 %v134, %v161
    %v163 = vmul.f32 %v162, 0.5
    %v164 = vtanh.pop %v163
    %v165 = vadd.f32 %v164, 1.0
    %v166 = vmul.f32 %v165, 0.5
    %v167 = vsub.f32 1.0, %v166
    %v168 = vmul.f32 %v166, %v167
    %169 = vmatpush.msra.mxu0 %v74
    %170 = vmatpush.msra.mxu0 %v73
    %171 = vmatpush.msra.mxu0 %v72
    %172 = vmatpush.msra.mxu0 %v71
    %173 = vmatpush.msra.mxu0 %v70
    %174 = vmatpush.msra.mxu0 %v69
    %175 = vmatpush.msra.mxu0 %v68
    %176 = vmatpush.msra.mxu0 %v67
    %177 = vmatpush.msra.mxu0 %v66
    %178 = vmatpush.msra.mxu0 %v65
    %179 = vmatpush.msra.mxu0 %v64
    %180 = vmatpush.msra.mxu0 %v63
    %181 = vmatpush.msra.mxu0 %v62
    %182 = vmatpush.msra.mxu0 %v61
    %183 = vmatpush.msra.mxu0 %v60
    %184 = vmatpush.msra.mxu0 %v59
    %185 = vmatmul.f32.gmra.mxu0 %v166
    %v186 = vpop.f32.mrf.mxu0
    %v187 = vadd.f32 %v58, %v186
    %188 = vdwg.mxu0
    %v189 = vmul.f32 %v187, %v168
    %v190 = vmul.f32 %v189, 0.5
    %v191 = vadd.f32 %v163, %v190
    %v192 = vmul.f32 %v191, 0.5
    %v193 = vtanh.pop %v192
    %v194 = vadd.f32 %v193, 1.0
    %v195 = vmul.f32 %v194, 0.5
    %v196 = vsub.f32 1.0, %v195
    %v197 = vmul.f32 %v195, %v196
    %198 = vmatpush.msra.mxu0 %v74
    %199 = vmatpush.msra.mxu0 %v73
    %200 = vmatpush.msra.mxu0 %v72
    %201 = vmatpush.msra.mxu0 %v71
    %202 = vmatpush.msra.mxu0 %v70
    %203 = vmatpush.msra.mxu0 %v69
    %204 = vmatpush.msra.mxu0 %v68
    %205 = vmatpush.msra.mxu0 %v67
    %206 = vmatpush.msra.mxu0 %v66
    %207 = vmatpush.msra.mxu0 %v65
    %208 = vmatpush.msra.mxu0 %v64
    %209 = vmatpush.msra.mxu0 %v63
    %210 = vmatpush.msra.mxu0 %v62
    %211 = vmatpush.msra.mxu0 %v61
    %212 = vmatpush.msra.mxu0 %v60
    %213 = vmatpush.msra.mxu0 %v59
    %214 = vmatmul.f32.gmra.mxu0 %v195
    %v215 = vpop.f32.mrf.mxu0
    %v216 = vadd.f32 %v58, %v215
    %217 = vdwg.mxu0
    %v218 = vmul.f32 %v216, %v197
    %v219 = vmul.f32 %v218, 0.5
    %v220 = vadd.f32 %v192, %v219
    %v221 = vmul.f32 %v220, 0.5
    %v222 = vtanh.pop %v221
    %v223 = vadd.f32 %v222, 1.0
    %v224 = vmul.f32 %v223, 0.5
    %v225 = vsub.f32 1.0, %v224
    %v226 = vmul.f32 %v224, %v225
    %227 = vmatpush.msra.mxu0 %v74
    %228 = vmatpush.msra.mxu0 %v73
    %229 = vmatpush.msra.mxu0 %v72
    %230 = vmatpush.msra.mxu0 %v71
    %231 = vmatpush.msra.mxu0 %v70
    %232 = vmatpush.msra.mxu0 %v69
    %233 = vmatpush.msra.mxu0 %v68
    %234 = vmatpush.msra.mxu0 %v67
    %235 = vmatpush.msra.mxu0 %v66
    %236 = vmatpush.msra.mxu0 %v65
    %237 = vmatpush.msra.mxu0 %v64
    %238 = vmatpush.msra.mxu0 %v63
    %239 = vmatpush.msra.mxu0 %v62
    %240 = vmatpush.msra.mxu0 %v61
    %241 = vmatpush.msra.mxu0 %v60
    %242 = vmatpush.msra.mxu0 %v59
    %243 = vmatmul.f32.gmra.mxu0 %v224
    %v244 = vpop.f32.mrf.mxu0
    %v245 = vadd.f32 %v58, %v244
    %246 = vdwg.mxu0
    %v247 = vmul.f32 %v245, %v226
    %v248 = vmul.f32 %v247, 0.5
    %v249 = vadd.f32 %v221, %v248
    %v250 = vmul.f32 %v249, 0.5
    %v251 = vtanh.pop %v250
    %v252 = vadd.f32 %v251, 1.0
    %v253 = vmul.f32 %v252, 0.5
    %v254 = vsub.f32 1.0, %v253
    %v255 = vmul.f32 %v253, %v254
    %256 = vmatpush.msra.mxu0 %v74
    %257 = vmatpush.msra.mxu0 %v73
    %258 = vmatpush.msra.mxu0 %v72
    %259 = vmatpush.msra.mxu0 %v71
    %260 = vmatpush.msra.mxu0 %v70
    %261 = vmatpush.msra.mxu0 %v69
    %262 = vmatpush.msra.mxu0 %v68
    %263 = vmatpush.msra.mxu0 %v67
    %264 = vmatpush.msra.mxu0 %v66
    %265 = vmatpush.msra.mxu0 %v65
    %266 = vmatpush.msra.mxu0 %v64
    %267 = vmatpush.msra.mxu0 %v63
    %268 = vmatpush.msra.mxu0 %v62
    %269 = vmatpush.msra.mxu0 %v61
    %270 = vmatpush.msra.mxu0 %v60
    %271 = vmatpush.msra.mxu0 %v59
    %272 = vmatmul.f32.gmra.mxu0 %v253
    %v273 = vpop.f32.mrf.mxu0
    %v274 = vadd.f32 %v58, %v273
    %275 = vdwg.mxu0
    %v276 = vmul.f32 %v274, %v255
    %v277 = vmul.f32 %v276, 0.5
    %v278 = vadd.f32 %v250, %v277
    %v279 = vmul.f32 %v278, 0.5
    %v280 = vtanh.pop %v279
    %v281 = vadd.f32 %v280, 1.0
    %v282 = vmul.f32 %v281, 0.5
    %v283 = vsub.f32 1.0, %v282
    %v284 = vmul.f32 %v282, %v283
    %285 = vmatpush.msra.mxu0 %v74
    %286 = vmatpush.msra.mxu0 %v73
    %287 = vmatpush.msra.mxu0 %v72
    %288 = vmatpush.msra.mxu0 %v71
    %289 = vmatpush.msra.mxu0 %v70
    %290 = vmatpush.msra.mxu0 %v69
    %291 = vmatpush.msra.mxu0 %v68
    %292 = vmatpush.msra.mxu0 %v67
    %293 = vmatpush.msra.mxu0 %v66
    %294 = vmatpush.msra.mxu0 %v65
    %295 = vmatpush.msra.mxu0 %v64
    %296 = vmatpush.msra.mxu0 %v63
    %297 = vmatpush.msra.mxu0 %v62
    %298 = vmatpush.msra.mxu0 %v61
    %299 = vmatpush.msra.mxu0 %v60
    %300 = vmatpush.msra.mxu0 %v59
    %301 = vmatmul.f32.gmra.mxu0 %v282
    %v302 = vpop.f32.mrf.mxu0
    %v303 = vadd.f32 %v58, %v302
    %304 = vdwg.mxu0
    %v305 = vmul.f32 %v303, %v284
    %v306 = vmul.f32 %v305, 0.5
    %v307 = vadd.f32 %v279, %v306
    %v308 = vmul.f32 %v307, 0.5
    %v309 = vtanh.pop %v308
    %v310 = vadd.f32 %v309, 1.0
    %v311 = vmul.f32 %v310, 0.5
    %v312 = vsub.f32 1.0, %v311
    %v313 = vmul.f32 %v311, %v312
    %314 = vmatpush.msra.mxu0 %v74
    %315 = vmatpush.msra.mxu0 %v73
    %316 = vmatpush.msra.mxu0 %v72
    %317 = vmatpush.msra.mxu0 %v71
    %318 = vmatpush.msra.mxu0 %v70
    %319 = vmatpush.msra.mxu0 %v69
    %320 = vmatpush.msra.mxu0 %v68
    %321 = vmatpush.msra.mxu0 %v67
    %322 = vmatpush.msra.mxu0 %v66
    %323 = vmatpush.msra.mxu0 %v65
    %324 = vmatpush.msra.mxu0 %v64
    %325 = vmatpush.msra.mxu0 %v63
    %326 = vmatpush.msra.mxu0 %v62
    %327 = vmatpush.msra.mxu0 %v61
    %328 = vmatpush.msra.mxu0 %v60
    %329 = vmatpush.msra.mxu0 %v59
    %330 = vmatmul.f32.gmra.mxu0 %v311
    %v331 = vpop.f32.mrf.mxu0
    %v332 = vadd.f32 %v58, %v331
    %333 = vdwg.mxu0
    %v334 = vmul.f32 %v332, %v313
    %v335 = vmul.f32 %v334, 0.5
    %v336 = vadd.f32 %v308, %v335
    %v337 = vmul.f32 %v336, 0.5
    %v338 = vtanh.pop %v337
    %v339 = vadd.f32 %v338, 1.0
    %v340 = vmul.f32 %v339, 0.5
    %v341 = vsub.f32 1.0, %v340
    %v342 = vmul.f32 %v340, %v341
    %343 = vmatpush.msra.mxu0 %v74
    %344 = vmatpush.msra.mxu0 %v73
    %345 = vmatpush.msra.mxu0 %v72
    %346 = vmatpush.msra.mxu0 %v71
    %347 = vmatpush.msra.mxu0 %v70
    %348 = vmatpush.msra.mxu0 %v69
    %349 = vmatpush.msra.mxu0 %v68
    %350 = vmatpush.msra.mxu0 %v67
    %351 = vmatpush.msra.mxu0 %v66
    %352 = vmatpush.msra.mxu0 %v65
    %353 = vmatpush.msra.mxu0 %v64
    %354 = vmatpush.msra.mxu0 %v63
    %355 = vmatpush.msra.mxu0 %v62
    %356 = vmatpush.msra.mxu0 %v61
    %357 = vmatpush.msra.mxu0 %v60
    %358 = vmatpush.msra.mxu0 %v59
    %359 = vmatmul.f32.gmra.mxu0 %v340
    %v360 = vpop.f32.mrf.mxu0
    %v361 = vadd.f32 %v58, %v360
    %362 = vdwg.mxu0
    %v363 = vmul.f32 %v361, %v342
    %v364 = vmul.f32 %v363, 0.5
    %v365 = vadd.f32 %v337, %v364
    %v366 = vmul.f32 %v365, 0.5
    %v367 = vtanh.pop %v366
    %v368 = vadd.f32 %v367, 1.0
    %v369 = vmul.f32 %v368, 0.5
    %v370 = vsub.f32 1.0, %v369
    %v371 = vmul.f32 %v369, %v370
    %372 = vmatpush.msra.mxu0 %v74
    %373 = vmatpush.msra.mxu0 %v73
    %374 = vmatpush.msra.mxu0 %v72
    %375 = vmatpush.msra.mxu0 %v71
    %376 = vmatpush.msra.mxu0 %v70
    %377 = vmatpush.msra.mxu0 %v69
    %378 = vmatpush.msra.mxu0 %v68
    %379 = vmatpush.msra.mxu0 %v67
    %380 = vmatpush.msra.mxu0 %v66
    %381 = vmatpush.msra.mxu0 %v65
    %382 = vmatpush.msra.mxu0 %v64
    %383 = vmatpush.msra.mxu0 %v63
    %384 = vmatpush.msra.mxu0 %v62
    %385 = vmatpush.msra.mxu0 %v61
    %386 = vmatpush.msra.mxu0 %v60
    %387 = vmatpush.msra.mxu0 %v59
    %388 = vmatmul.f32.gmra.mxu0 %v369
    %v389 = vpop.f32.mrf.mxu0
    %v390 = vadd.f32 %v58, %v389
    %391 = vdwg.mxu0
    %v392 = vmul.f32 %v390, %v371
    %v393 = vmul.f32 %v392, 0.5
    %v394 = vadd.f32 %v366, %v393
    %v395 = vmul.f32 %v394, 0.5
    %v396 = vtanh.pop %v395
    %v397 = vadd.f32 %v396, 1.0
    %v398 = vmul.f32 %v397, 0.5
    %v399 = vsub.f32 1.0, %v398
    %v400 = vmul.f32 %v398, %v399
    %401 = vmatpush.msra.mxu0 %v74
    %402 = vmatpush.msra.mxu0 %v73
    %403 = vmatpush.msra.mxu0 %v72
    %404 = vmatpush.msra.mxu0 %v71
    %405 = vmatpush.msra.mxu0 %v70
    %406 = vmatpush.msra.mxu0 %v69
    %407 = vmatpush.msra.mxu0 %v68
    %408 = vmatpush.msra.mxu0 %v67
    %409 = vmatpush.msra.mxu0 %v66
    %410 = vmatpush.msra.mxu0 %v65
    %411 = vmatpush.msra.mxu0 %v64
    %412 = vmatpush.msra.mxu0 %v63
    %413 = vmatpush.msra.mxu0 %v62
    %414 = vmatpush.msra.mxu0 %v61
    %415 = vmatpush.msra.mxu0 %v60
    %416 = vmatpush.msra.mxu0 %v59
    %417 = vmatmul.f32.gmra.mxu0 %v398
    %v418 = vpop.f32.mrf.mxu0
    %v419 = vadd.f32 %v58, %v418
    %420 = vdwg.mxu0
    %v421 = vmul.f32 %v419, %v400
    %v422 = vmul.f32 %v421, 0.5
    %v423 = vadd.f32 %v395, %v422
    %v424 = vmul.f32 %v423, 0.5
    %v425 = vtanh.pop %v424
    %v426 = vadd.f32 %v425, 1.0
    %v427 = vmul.f32 %v426, 0.5
    %v428 = vsub.f32 1.0, %v427
    %v429 = vmul.f32 %v427, %v428
    %430 = vmatpush.msra.mxu0 %v74
    %431 = vmatpush.msra.mxu0 %v73
    %432 = vmatpush.msra.mxu0 %v72
    %433 = vmatpush.msra.mxu0 %v71
    %434 = vmatpush.msra.mxu0 %v70
    %435 = vmatpush.msra.mxu0 %v69
    %436 = vmatpush.msra.mxu0 %v68
    %437 = vmatpush.msra.mxu0 %v67
    %438 = vmatpush.msra.mxu0 %v66
    %439 = vmatpush.msra.mxu0 %v65
    %440 = vmatpush.msra.mxu0 %v64
    %441 = vmatpush.msra.mxu0 %v63
    %442 = vmatpush.msra.mxu0 %v62
    %443 = vmatpush.msra.mxu0 %v61
    %444 = vmatpush.msra.mxu0 %v60
    %445 = vmatpush.msra.mxu0 %v59
    %446 = vmatmul.f32.gmra.mxu0 %v427
    %v447 = vpop.f32.mrf.mxu0
    %v448 = vadd.f32 %v58, %v447
    %449 = vdwg.mxu0
    %v450 = vmul.f32 %v448, %v429
    %v451 = vmul.f32 %v450, 0.5
    %v452 = vadd.f32 %v424, %v451
    %v453 = vmul.f32 %v452, 0.5
    %v454 = vtanh.pop %v453
    %v455 = vadd.f32 %v454, 1.0
    %v456 = vmul.f32 %v455, 0.5
    %v457 = vsub.f32 1.0, %v456
    %v458 = vmul.f32 %v456, %v457
    %459 = vmatpush.msra.mxu0 %v74
    %460 = vmatpush.msra.mxu0 %v73
    %461 = vmatpush.msra.mxu0 %v72
    %462 = vmatpush.msra.mxu0 %v71
    %463 = vmatpush.msra.mxu0 %v70
    %464 = vmatpush.msra.mxu0 %v69
    %465 = vmatpush.msra.mxu0 %v68
    %466 = vmatpush.msra.mxu0 %v67
    %467 = vmatpush.msra.mxu0 %v66
    %468 = vmatpush.msra.mxu0 %v65
    %469 = vmatpush.msra.mxu0 %v64
    %470 = vmatpush.msra.mxu0 %v63
    %471 = vmatpush.msra.mxu0 %v62
    %472 = vmatpush.msra.mxu0 %v61
    %473 = vmatpush.msra.mxu0 %v60
    %474 = vmatpush.msra.mxu0 %v59
    %475 = vmatmul.f32.gmra.mxu0 %v456
    %v476 = vpop.f32.mrf.mxu0
    %v477 = vadd.f32 %v58, %v476
    %478 = vdwg.mxu0
    %v479 = vmul.f32 %v477, %v458
    %v480 = vmul.f32 %v479, 0.5
    %v481 = vadd.f32 %v453, %v480
    %v482 = vmul.f32 %v481, 0.5
    %v483 = vtanh.pop %v482
    %v484 = vadd.f32 %v483, 1.0
    %v485 = vmul.f32 %v484, 0.5
    %v486 = vsub.f32 1.0, %v485
    %v487 = vmul.f32 %v485, %v486
    %488 = vmatpush.msra.mxu0 %v74
    %489 = vmatpush.msra.mxu0 %v73
    %490 = vmatpush.msra.mxu0 %v72
    %491 = vmatpush.msra.mxu0 %v71
    %492 = vmatpush.msra.mxu0 %v70
    %493 = vmatpush.msra.mxu0 %v69
    %494 = vmatpush.msra.mxu0 %v68
    %495 = vmatpush.msra.mxu0 %v67
    %496 = vmatpush.msra.mxu0 %v66
    %497 = vmatpush.msra.mxu0 %v65
    %498 = vmatpush.msra.mxu0 %v64
    %499 = vmatpush.msra.mxu0 %v63
    %500 = vmatpush.msra.mxu0 %v62
    %501 = vmatpush.msra.mxu0 %v61
    %502 = vmatpush.msra.mxu0 %v60
    %503 = vmatpush.msra.mxu0 %v59
    %504 = vmatmul.f32.gmra.mxu0 %v485
    %v505 = vpop.f32.mrf.mxu0
    %v506 = vadd.f32 %v58, %v505
    %507 = vdwg.mxu0
    %v508 = vmul.f32 %v506, %v487
    %v509 = vmul.f32 %v508, 0.5
    %v510 = vadd.f32 %v482, %v509
    %v511 = vmul.f32 %v510, 0.5
    %v512 = vtanh.pop %v511
    %v513 = vadd.f32 %v512, 1.0
    %v514 = vmul.f32 %v513, 0.5
    %v515 = vsub.f32 1.0, %v514
    %v516 = vmul.f32 %v514, %v515
    %517 = vmatpush.msra.mxu0 %v74
    %518 = vmatpush.msra.mxu0 %v73
    %519 = vmatpush.msra.mxu0 %v72
    %520 = vmatpush.msra.mxu0 %v71
    %521 = vmatpush.msra.mxu0 %v70
    %522 = vmatpush.msra.mxu0 %v69
    %523 = vmatpush.msra.mxu0 %v68
    %524 = vmatpush.msra.mxu0 %v67
    %525 = vmatpush.msra.mxu0 %v66
    %526 = vmatpush.msra.mxu0 %v65
    %527 = vmatpush.msra.mxu0 %v64
    %528 = vmatpush.msra.mxu0 %v63
    %529 = vmatpush.msra.mxu0 %v62
    %530 = vmatpush.msra.mxu0 %v61
    %531 = vmatpush.msra.mxu0 %v60
    %532 = vmatpush.msra.mxu0 %v59
    %533 = vmatmul.f32.gmra.mxu0 %v514
    %v534 = vpop.f32.mrf.mxu0
    %v535 = vadd.f32 %v58, %v534
    %536 = vdwg.mxu0
    %v537 = vmul.f32 %v535, %v516
    %v538 = vmul.f32 %v537, 0.5
    %v539 = vadd.f32 %v511, %v538
    %v540 = vmul.f32 %v539, 0.5
    %v541 = vtanh.pop %v540
    %v542 = vadd.f32 %v541, 1.0
    %v543 = vmul.f32 %v542, 0.5
    %v544 = vsub.f32 1.0, %v543
    %v545 = vmul.f32 %v543, %v544
    %546 = vmatpush.msra.mxu0 %v74
    %547 = vmatpush.msra.mxu0 %v73
    %548 = vmatpush.msra.mxu0 %v72
    %549 = vmatpush.msra.mxu0 %v71
    %550 = vmatpush.msra.mxu0 %v70
    %551 = vmatpush.msra.mxu0 %v69
    %552 = vmatpush.msra.mxu0 %v68
    %553 = vmatpush.msra.mxu0 %v67
    %554 = vmatpush.msra.mxu0 %v66
    %555 = vmatpush.msra.mxu0 %v65
    %556 = vmatpush.msra.mxu0 %v64
    %557 = vmatpush.msra.mxu0 %v63
    %558 = vmatpush.msra.mxu0 %v62
    %559 = vmatpush.msra.mxu0 %v61
    %560 = vmatpush.msra.mxu0 %v60
    %561 = vmatpush.msra.mxu0 %v59
    %562 = vmatmul.f32.gmra.mxu0 %v543
    %v563 = vpop.f32.mrf.mxu0
    %v564 = vadd.f32 %v58, %v563
    %565 = vdwg.mxu0
    %v566 = vmul.f32 %v564, %v545
    %v567 = vmul.f32 %v566, 0.5
    %v568 = vadd.f32 %v540, %v567
    %v569 = vmul.f32 %v568, 0.5
    %v570 = vtanh.pop %v569
    %v571 = vadd.f32 %v570, 1.0
    %v572 = vmul.f32 %v571, 0.5
    %v573 = vsub.f32 1.0, %v572
    %v574 = vmul.f32 %v572, %v573
    %575 = vmatpush.msra.mxu0 %v74
    %576 = vmatpush.msra.mxu0 %v73
    %577 = vmatpush.msra.mxu0 %v72
    %578 = vmatpush.msra.mxu0 %v71
    %579 = vmatpush.msra.mxu0 %v70
    %580 = vmatpush.msra.mxu0 %v69
    %581 = vmatpush.msra.mxu0 %v68
    %582 = vmatpush.msra.mxu0 %v67
    %583 = vmatpush.msra.mxu0 %v66
    %584 = vmatpush.msra.mxu0 %v65
    %585 = vmatpush.msra.mxu0 %v64
    %586 = vmatpush.msra.mxu0 %v63
    %587 = vmatpush.msra.mxu0 %v62
    %588 = vmatpush.msra.mxu0 %v61
    %589 = vmatpush.msra.mxu0 %v60
    %590 = vmatpush.msra.mxu0 %v59
    %591 = vmatmul.f32.gmra.mxu0 %v572
    %v592 = vpop.f32.mrf.mxu0
    %v593 = vadd.f32 %v58, %v592
    %594 = vdwg.mxu0
    %v595 = vmul.f32 %v593, %v574
    %v596 = vmul.f32 %v595, 0.5
    %v597 = vadd.f32 %v569, %v596
    %v598 = vmul.f32 %v597, 0.5
    %v599 = vtanh.pop %v598
    %v600 = vadd.f32 %v599, 1.0
    %v601 = vmul.f32 %v600, 0.5
    %v602 = vsub.f32 1.0, %v601
    %v603 = vmul.f32 %v601, %v602
    %604 = vmatpush.msra.mxu0 %v74
    %605 = vmatpush.msra.mxu0 %v73
    %606 = vmatpush.msra.mxu0 %v72
    %607 = vmatpush.msra.mxu0 %v71
    %608 = vmatpush.msra.mxu0 %v70
    %609 = vmatpush.msra.mxu0 %v69
    %610 = vmatpush.msra.mxu0 %v68
    %611 = vmatpush.msra.mxu0 %v67
    %612 = vmatpush.msra.mxu0 %v66
    %613 = vmatpush.msra.mxu0 %v65
    %614 = vmatpush.msra.mxu0 %v64
    %615 = vmatpush.msra.mxu0 %v63
    %616 = vmatpush.msra.mxu0 %v62
    %617 = vmatpush.msra.mxu0 %v61
    %618 = vmatpush.msra.mxu0 %v60
    %619 = vmatpush.msra.mxu0 %v59
    %620 = vmatmul.f32.gmra.mxu0 %v601
    %v621 = vpop.f32.mrf.mxu0
    %v622 = vadd.f32 %v58, %v621
    %623 = vdwg.mxu0
    %v624 = vmul.f32 %v622, %v603
    %v625 = vmul.f32 %v624, 0.5
    %v626 = vadd.f32 %v598, %v625
    %v627 = vmul.f32 %v626, 0.5
    %v628 = vtanh.pop %v627
    %v629 = vadd.f32 %v628, 1.0
    %v630 = vmul.f32 %v629, 0.5
    %v631 = vsub.f32 1.0, %v630
    %v632 = vmul.f32 %v630, %v631
    %633 = vmatpush.msra.mxu0 %v74
    %634 = vmatpush.msra.mxu0 %v73
    %635 = vmatpush.msra.mxu0 %v72
    %636 = vmatpush.msra.mxu0 %v71
    %637 = vmatpush.msra.mxu0 %v70
    %638 = vmatpush.msra.mxu0 %v69
    %639 = vmatpush.msra.mxu0 %v68
    %640 = vmatpush.msra.mxu0 %v67
    %641 = vmatpush.msra.mxu0 %v66
    %642 = vmatpush.msra.mxu0 %v65
    %643 = vmatpush.msra.mxu0 %v64
    %644 = vmatpush.msra.mxu0 %v63
    %645 = vmatpush.msra.mxu0 %v62
    %646 = vmatpush.msra.mxu0 %v61
    %647 = vmatpush.msra.mxu0 %v60
    %648 = vmatpush.msra.mxu0 %v59
    %649 = vmatmul.f32.gmra.mxu0 %v630
    %v650 = vpop.f32.mrf.mxu0
    %v651 = vadd.f32 %v58, %v650
    %652 = vdwg.mxu0
    %v653 = vmul.f32 %v651, %v632
    %v654 = vmul.f32 %v653, 0.5
    %v655 = vadd.f32 %v627, %v654
    %v656 = vmul.f32 %v655, 0.5
    %v657 = vtanh.pop %v656
    %v658 = vadd.f32 %v657, 1.0
    %v659 = vmul.f32 %v658, 0.5
    %660 = vst [vmem:[#allocation8] sm:$0xff] %v659
    // Predicated region
    $region26: #{tpu_custom_call.1} parent=1 // pred_check
      _
    $region27: #{tpu_custom_call.1} parent=1 // pred_check_branch
      %662 = sbr.rel (0) target = $region29
    $region28: #{tpu_custom_call.1} parent=1 // pred_region
      %664 = vsyncadd [#allocation4], 0
      %s666 = sshll.u32 [#allocation8], 4
      %s667 = int_to_ptr.vmem [resolvable:$true] %s666
      %s668 = sshll.u32 %s3, 4
      %s669 = int_to_ptr.hbm [resolvable:$true] %s668
      %671 = dma.vmem_to_hbm [thread:$0]  %s667, 128, %s669, [#allocation4]
    $region29: #{tpu_custom_call.1} parent=1 // pred_fallthru
      _
    // Predicated region
    $region30: #{tpu_custom_call.1} parent=1 // pred_check
      _
    $region31: #{tpu_custom_call.1} parent=1 // pred_check_branch
      %673 = sbr.rel (0) target = $region33
    $region32: #{tpu_custom_call.1} parent=1 // pred_region
      %675 = dma.done [#allocation4], 128
    $region33: #{tpu_custom_call.1} parent=1 // pred_fallthru
      _
    %676 = vsyncpa [#allocation3], 1
    %677 = vsyncpa [#allocation6], 1
    %678 = vsyncpa [#allocation4], 1

</llo_original>
